<compile_context>
chip_gen: v7x
topology: tpu7x:2x2x1
jax: 0.10.0
libtpu: 0.0.40
codegen_flags: <defaults>
</compile_context>

<pallas_src>
import functools

import jax
import jax.numpy as jnp
from jax.experimental import pallas as pl
from jax.experimental.pallas import tpu as pltpu

HIDDEN = 64    # nn.Linear(in_dim, 64) per the PyTorch module
LANES = 128    # lane width: hidden/out padded to this for unmasked stores / full MXU width


def _round_up(x, m):
    return (x + m - 1) // m * m


def _mlp_kernel(x_ref, p_ref, out_ref, *, in_dim, b1_row, w2_row, b2_row, compute_dtype):
    # Packed-params layout (rows, 128); section starts are sublane-pack aligned
    # (16 rows for bf16, 8 for f32):
    #   [0, in_dim)            : w1  (in_dim, 128)  -- zero cols >= 64
    #   row b1_row             : b1  (1, 128)       -- zero lanes >= 64
    #   [w2_row, w2_row + 128) : w2  (128, 128)     -- zero rows >= 64, zero cols >= out_dim
    #   row b2_row             : b2  (1, 128)       -- zero lanes >= out_dim
    w1 = p_ref[0:in_dim, :]                              # (in_dim, 128)
    b1 = p_ref[b1_row:b1_row + 1, :].astype(jnp.float32)  # (1, 128)
    w2 = p_ref[w2_row:w2_row + LANES, :]                  # (128, 128)
    b2 = p_ref[b2_row:b2_row + 1, :].astype(jnp.float32)  # (1, 128)

    # MXU operands in compute_dtype (bf16 by default), accumulation in f32.
    x = x_ref[...].astype(compute_dtype)
    # fc1 + tanh, strictly f32 on the VPU/EUP.  Padded hidden lanes: tanh(0 + 0) == 0,
    # and they hit all-zero rows of w2, so they contribute nothing to fc2.
    h = jnp.dot(x, w1, preferred_element_type=jnp.float32) + b1
    h = jnp.tanh(h)
    # fc2
    y = jnp.dot(h.astype(compute_dtype), w2, preferred_element_type=jnp.float32) + b2
    out_ref[...] = y.astype(out_ref.dtype)


def pack_mlp_params(w1, b1, w2, b2, *, param_dtype=jnp.bfloat16):
    """Pack w1|b1|w2|b2 into ONE lane-dense (rows, 128) buffer -> a single params DMA.

    Call once per weight update (not per forward call) and pass the result to
    mlp_forward.  Weights are stored (in, out) so the kernel computes x @ W.
    """
    in_dim, hidden = w1.shape
    out_dim = w2.shape[1]
    assert hidden == HIDDEN, "module fixes the hidden layer at 64"
    assert hidden <= LANES and out_dim <= LANES

    align = 16 if jnp.dtype(param_dtype).itemsize == 2 else 8
    sec1 = _round_up(max(in_dim, 1), align)
    b1_row = sec1
    w2_row = sec1 + align
    b2_row = w2_row + LANES
    rows = b2_row + align

    p = jnp.zeros((rows, LANES), param_dtype)
    p = p.at[:in_dim, :hidden].set(w1.astype(param_dtype))
    p = p.at[b1_row, :hidden].set(b1.astype(param_dtype))
    p = p.at[w2_row:w2_row + hidden, :out_dim].set(w2.astype(param_dtype))
    p = p.at[b2_row, :out_dim].set(b2.astype(param_dtype))
    return p


def mlp_forward(x, packed_params, out_dim, *, block_batch=1024, core_parallel=False):
    """Fused fc1 -> tanh -> fc2.

    x             : (B, in_dim), f32 (or bf16: supplying bf16 halves the input DMA)
    packed_params : output of pack_mlp_params (packed once per weight update)
    returns (B, out_dim) f32
    """
    B, in_dim = x.shape
    pdtype = packed_params.dtype
    align = 16 if jnp.dtype(pdtype).itemsize == 2 else 8
    sec1 = _round_up(max(in_dim, 1), align)
    b1_row, w2_row = sec1, sec1 + align
    b2_row = w2_row + LANES
    p_rows = packed_params.shape[0]
    assert p_rows == b2_row + align, "packed_params does not match x's in_dim / dtype"

    # Batch tiling: big tiles for DMA efficiency, but keep >=2 grid steps whenever the
    # batch allows it so each core's pipeline has DMA/compute overlap.  bm is forced
    # to a multiple of 8.  No padded copy of x: grid = cdiv(B, bm); a ragged last tile
    # reads garbage tail rows that only feed garbage tail output rows (row-independent
    # matmul), and those are dropped by the final slice.
    bm = max(8, _round_up(min(block_batch, B), 8))
    if B > 8:
        bm = min(bm, _round_up(pl.cdiv(B, 2), 8))
    grid = pl.cdiv(B, bm)
    b_pad = grid * bm

    kernel = functools.partial(
        _mlp_kernel, in_dim=in_dim, b1_row=b1_row, w2_row=w2_row, b2_row=b2_row,
        compute_dtype=pdtype)

    cost = pl.CostEstimate(
        flops=2 * b_pad * (in_dim * LANES + LANES * LANES),
        transcendentals=b_pad * LANES,
        bytes_accessed=(x.size * x.dtype.itemsize
                        + packed_params.size * packed_params.dtype.itemsize
                        + b_pad * LANES * 4),
    )

    # v7x: core_parallel=True shards the batch grid across both TensorCores.
    batch_sem = pltpu.CORE_PARALLEL if core_parallel else "parallel"

    out_padded = pl.pallas_call(
        kernel,
        out_shape=jax.ShapeDtypeStruct((b_pad, LANES), jnp.float32),
        grid_spec=pltpu.PrefetchScalarGridSpec(
            num_scalar_prefetch=0,
            grid=(grid,),
            in_specs=[
                # x: one bm-row tile per grid step (auto double-buffered / pipelined)
                pl.BlockSpec((bm, in_dim), lambda i: (i, 0)),
                # packed params: constant block index -> DMA'd once, VMEM-resident;
                # single-buffered since it never changes.
                pl.BlockSpec((p_rows, LANES), lambda i: (0, 0),
                             pipeline_mode=pl.Buffered(1)),
            ],
            # lane-dense (bm, 128) output slab -> unmasked full-width stores
            out_specs=pl.BlockSpec((bm, LANES), lambda i: (i, 0)),
        ),
        compiler_params=pltpu.CompilerParams(
            dimension_semantics=(batch_sem,),
        ),
        cost_estimate=cost,
    )(x, packed_params)

    # Strip any ragged-batch tail and the padded output lanes outside the kernel.
    # TODO(synk): if the consumer (Categorical over logits) can read the padded
    # (B, 128) slab with a mask, drop this slice to save one pass over the output.
    return out_padded[:B, :out_dim]


def init_mlp_params(key, in_dim, out_dim, hidden=HIDDEN):
    """Deterministic init matching nn.Linear's U(-1/sqrt(fan_in), 1/sqrt(fan_in))."""
    k1, k2, k3, k4 = jax.random.split(key, 4)
    bound1 = 1.0 / jnp.sqrt(in_dim)
    bound2 = 1.0 / jnp.sqrt(hidden)
    # Stored already transposed relative to PyTorch (in, out) so kernel does x @ W.
    w1 = jax.random.uniform(k1, (in_dim, hidden), jnp.float32, -bound1, bound1)
    b1 = jax.random.uniform(k2, (hidden,), jnp.float32, -bound1, bound1)
    w2 = jax.random.uniform(k3, (hidden, out_dim), jnp.float32, -bound2, bound2)
    b2 = jax.random.uniform(k4, (out_dim,), jnp.float32, -bound2, bound2)
    return w1, b1, w2, b2


if __name__ == "__main__":
    key = jax.random.PRNGKey(0)
    kx, kp = jax.random.split(key)

    # Rollout-sized batch but still tiny data: 512 * 32 * 4 = 64 KiB of activations.
    batch, in_dim, out_dim = 512, 32, 8
    x = jax.random.normal(kx, (batch, in_dim), dtype=jnp.float32)
    w1, b1, w2, b2 = init_mlp_params(kp, in_dim, out_dim)

    # Pack once (per weight update), reuse across every forward call.
    params_bf16 = pack_mlp_params(w1, b1, w2, b2)                   # bf16 MXU operands
    out = mlp_forward(x, params_bf16, out_dim, block_batch=1024)    # grid = (2,)
    jax.block_until_ready(out)

    # Reference (pure JAX, f32) — same math as the PyTorch forward.
    ref = jnp.tanh(x @ w1 + b1) @ w2 + b2
    assert out.shape == (batch, out_dim)
    # bf16 MXU operands -> ~1e-2-level differences vs the f32 reference (fine for PPO).
    assert jnp.allclose(out, ref, atol=3e-2, rtol=3e-2), float(jnp.abs(out - ref).max())

    # Exact-f32 path sanity check (param_dtype=f32 -> f32 operands, tight tolerance).
    params_f32 = pack_mlp_params(w1, b1, w2, b2, param_dtype=jnp.float32)
    out_f32 = mlp_forward(x, params_f32, out_dim, block_batch=1024)
    jax.block_until_ready(out_f32)
    assert jnp.allclose(out_f32, ref, atol=1e-4, rtol=1e-4), \
        float(jnp.abs(out_f32 - ref).max())

    print("KERNEL_OK")
</pallas_src>

<mosaic_0001>
module attributes {stable_mosaic.version = 11 : i64} {
  func.func @_mlp_kernel(%arg0: i32, %arg1: memref<256x32xf32, #tpu.memory_space<vmem>>, %arg2: memref<192x128xbf16, #tpu.memory_space<vmem>>, %arg3: memref<256x128xf32, #tpu.memory_space<vmem>>) attributes {dimension_semantics = [#tpu.dimension_semantics<parallel>], iteration_bounds = array<i64: 2>, scalar_prefetch = 0 : i64, scratch_operands = 0 : i64, tpu.core_type = #tpu.core_type<tc>, window_params = [{transform_indices = @transform_0, window_bounds = array<i64: 256, 32>}, {pipeline_mode = #tpu.pipeline_mode<synchronous>, transform_indices = @transform_1, window_bounds = array<i64: 192, 128>}, {transform_indices = @transform_2, window_bounds = array<i64: 256, 128>}]} {
    %c0 = arith.constant 0 : index
    %c0_0 = arith.constant 0 : index
    %0 = vector.load %arg2[%c0, %c0_0] : memref<192x128xbf16, #tpu.memory_space<vmem>>, vector<32x128xbf16>
    %c32 = arith.constant 32 : index
    %c0_1 = arith.constant 0 : index
    %1 = vector.load %arg2[%c32, %c0_1] : memref<192x128xbf16, #tpu.memory_space<vmem>>, vector<1x128xbf16>
    %2 = arith.extf %1 : vector<1x128xbf16> to vector<1x128xf32>
    %c48 = arith.constant 48 : index
    %c0_2 = arith.constant 0 : index
    %3 = vector.load %arg2[%c48, %c0_2] : memref<192x128xbf16, #tpu.memory_space<vmem>>, vector<128x128xbf16>
    %c176 = arith.constant 176 : index
    %c0_3 = arith.constant 0 : index
    %4 = vector.load %arg2[%c176, %c0_3] : memref<192x128xbf16, #tpu.memory_space<vmem>>, vector<1x128xbf16>
    %5 = arith.extf %4 : vector<1x128xbf16> to vector<1x128xf32>
    %c0_4 = arith.constant 0 : index
    %c0_5 = arith.constant 0 : index
    %6 = vector.load %arg1[%c0_4, %c0_5] : memref<256x32xf32, #tpu.memory_space<vmem>>, vector<256x32xf32>
    %7 = arith.truncf %6 : vector<256x32xf32> to vector<256x32xbf16>
    %cst = arith.constant dense<0.000000e+00> : vector<256x128xf32>
    %8 = tpu.matmul %7, %0, %cst {dimension_numbers = #tpu.dot_dimension_numbers<[1], [0], [0], [1], [0, 0, 1, 1], [], []>} : vector<256x32xbf16>, vector<32x128xbf16>, vector<256x128xf32> -> vector<256x128xf32>
    %9 = vector.broadcast %2 : vector<1x128xf32> to vector<256x128xf32>
    %10 = arith.addf %8, %9 : vector<256x128xf32>
    %11 = math.tanh %10 : vector<256x128xf32>
    %12 = arith.truncf %11 : vector<256x128xf32> to vector<256x128xbf16>
    %cst_6 = arith.constant dense<0.000000e+00> : vector<256x128xf32>
    %13 = tpu.matmul %12, %3, %cst_6 {dimension_numbers = #tpu.dot_dimension_numbers<[1], [0], [0], [1], [0, 0, 1, 1], [], []>} : vector<256x128xbf16>, vector<128x128xbf16>, vector<256x128xf32> -> vector<256x128xf32>
    %14 = vector.broadcast %5 : vector<1x128xf32> to vector<256x128xf32>
    %15 = arith.addf %13, %14 : vector<256x128xf32>
    %c0_7 = arith.constant 0 : index
    %c0_8 = arith.constant 0 : index
    %16 = vector.load %arg3[%c0_7, %c0_8] : memref<256x128xf32, #tpu.memory_space<vmem>>, vector<256x128xf32>
    tpu.vector_store %arg3[%c0_7, %c0_8], %15 {strides = array<i32>} : memref<256x128xf32, #tpu.memory_space<vmem>>, vector<256x128xf32>,
    return
  }
  func.func @transform_0(%arg0: i32) -> (i32, i32) {
    %c0_i32 = arith.constant 0 : i32
    %c0_i32_0 = arith.constant 0 : i32
    return %arg0, %c0_i32 : i32, i32
  }
  func.func @transform_1(%arg0: i32) -> (i32, i32) {
    %c0_i32 = arith.constant 0 : i32
    %c0_i32_0 = arith.constant 0 : i32
    %c0_i32_1 = arith.constant 0 : i32
    return %c0_i32, %c0_i32_0 : i32, i32
  }
  func.func @transform_2(%arg0: i32) -> (i32, i32) {
    %c0_i32 = arith.constant 0 : i32
    %c0_i32_0 = arith.constant 0 : i32
    return %arg0, %c0_i32 : i32, i32
  }
}

</mosaic_0001>

<llo_original>
// kernel: tpu_custom_call.1
$region0: #{tpu_custom_call.1}
  #allocation0 [shape = 'u32[]', space=smem, size = 0x4, offset = 0x4, fixed_abs, tag = 'smem constant byte address 0x4 - core index']
  #allocation1 [shape = 'u32[144,128]{1,0:T(1,128)}', space=vmem, size = 0x12000, scoped, tag = 'internal scratch']
  %s0 = inlined_call_operand.vmem [shape: f32[512,32], index: 0, kind: input, shape index: {}]
  %s1 = inlined_call_operand.vmem [shape: bf16[192,128], index: 1, kind: input, shape index: {}]
  %s2 = inlined_call_operand.hbm [shape: f32[512,128], index: 2, kind: output, shape index: {}]
  %s3 = sld [smem:[#allocation0]]
  $region41: #{tpu_custom_call.1} parent=0
    _
  %s5 = ssub.s32 1, %s3
  %s6 = scalar_select 0, %s5, %s3
  $region1: #{tpu_custom_call.1} parent=0
    #allocation2 [shape = 'u8[262144]{0}', space=vmem, size = 0x40000, scoped, tag = 'output window, operand 0']
    #allocation3 [shape = 's32[2]{0}', space=sflag, size = 0x8, scoped, tag = 'scoped memory for tpu_custom_call.1']
    %7 = vsyncpa [#allocation3], 0
    %s8 = scalar_lea.sflag [#allocation3], 1
    %9 = vsyncpa %s8, 0
    loop: start=0, step=1, limit=4
    $region2: #{tpu_custom_call.1} parent=1 // loop_pre_header
      _
    $region3: #{tpu_custom_call.1} parent=1 // loop_header
      %s11 = sphi 0, %s15
      %p12 = scmp.ge.s32.totalorder %s11, 4
      %s21 = sphi 0, %s23
      %s24 = sphi 0, %s21
      %s25 = sphi 0, %s24
      %s41 = sphi 0, %s25
      %s45 = sphi 0, %s45
      %s47 = sphi 0, %s45
      %s48 = sphi 0, %s47
      %s62 = sphi 0, %s48
      %s68 = sphi 0, %s70
      %s71 = sphi 0, %s68
      %s72 = sphi 0, %s71
      %s88 = sphi 0, %s72
    $region4: #{tpu_custom_call.1} parent=1 // loop_header_branch
      %14 = sbr.rel (%p12) target = $region8
    $region5: #{tpu_custom_call.1} parent=1 // loop_body
      %s16 = ssub.s32 %s11, 1
      %s17 = ssub.s32 %s11, 2
      %s18 = sadd.s32 %s11, 1
      %s19 = ssub.s32 %s11, %s18
      %p20 = scmp.eq.s32.totalorder %s19, 0
      %s22 = sadd.s32 %s21, 1
      %s23 = scalar_select %p20, %s21, %s22
      %p26 = pneg %p20
      %p27 = scmp.eq.s32.totalorder %s11, 1
      %p28 = por %p26, %p27
      %p29 = scmp.ne.s32.totalorder %s21, %s24
      %p30 = scmp.eq.s32.totalorder %s11, 0
      %p31 = por %p29, %p30
      %p32 = scmp.ne.s32.totalorder %s21, %s24
      %p33 = scmp.eq.s32.totalorder %s16, 1
      %p34 = por %p32, %p33
      %p35 = scmp.ne.s32.totalorder %s24, %s25
      %p36 = scmp.eq.s32.totalorder %s16, 0
      %p37 = por %p35, %p36
      %p38 = scmp.ne.s32.totalorder %s24, %s25
      %p39 = scmp.eq.s32.totalorder %s17, 1
      %p40 = por %p38, %p39
      %p42 = scmp.ne.s32.totalorder %s25, %s41
      %p43 = scmp.eq.s32.totalorder %s17, 0
      %p44 = por %p42, %p43
      %s46 = sadd.s32 %s45, 1
      %p49 = scmp.eq.s32.totalorder %s11, 1
      %p50 = scmp.ne.s32.totalorder %s45, %s47
      %p51 = scmp.eq.s32.totalorder %s11, 0
      %p52 = por %p50, %p51
      %p53 = scmp.ne.s32.totalorder %s45, %s47
      %p54 = scmp.eq.s32.totalorder %s16, 1
      %p55 = por %p53, %p54
      %p56 = scmp.ne.s32.totalorder %s47, %s48
      %p57 = scmp.eq.s32.totalorder %s16, 0
      %p58 = por %p56, %p57
      %p59 = scmp.ne.s32.totalorder %s47, %s48
      %p60 = scmp.eq.s32.totalorder %s17, 1
      %p61 = por %p59, %p60
      %p63 = scmp.ne.s32.totalorder %s48, %s62
      %p64 = scmp.eq.s32.totalorder %s17, 0
      %p65 = por %p63, %p64
      %s66 = ssub.s32 %s11, %s18
      %p67 = scmp.eq.s32.totalorder %s66, 0
      %s69 = sadd.s32 %s68, 1
      %s70 = scalar_select %p67, %s68, %s69
      %p73 = pneg %p67
      %p74 = scmp.eq.s32.totalorder %s11, 1
      %p75 = por %p73, %p74
      %p76 = scmp.ne.s32.totalorder %s68, %s71
      %p77 = scmp.eq.s32.totalorder %s11, 0
      %p78 = por %p76, %p77
      %p79 = scmp.ne.s32.totalorder %s68, %s71
      %p80 = scmp.eq.s32.totalorder %s16, 1
      %p81 = por %p79, %p80
      %p82 = scmp.ne.s32.totalorder %s71, %s72
      %p83 = scmp.eq.s32.totalorder %s16, 0
      %p84 = por %p82, %p83
      %p85 = scmp.ne.s32.totalorder %s71, %s72
      %p86 = scmp.eq.s32.totalorder %s17, 1
      %p87 = por %p85, %p86
      %p89 = scmp.ne.s32.totalorder %s72, %s88
      %p90 = scmp.eq.s32.totalorder %s17, 0
      %p91 = por %p89, %p90
      %p92 = scmp.le.s32.totalorder 1, %s11
      %p93 = scmp.lt.s32.totalorder %s11, 3
      %p94 = pnand %p92, %p93
      %p95 = pneg %p94
      // Predicated region
      $region9: #{tpu_custom_call.1} parent=5 // pred_check
        _
      $region10: #{tpu_custom_call.1} parent=5 // pred_check_branch
        %97 = sbr.rel (%p94) target = $region12
      $region11: #{tpu_custom_call.1} parent=5 // pred_region
        %s98 = ssub.s32 %s11, 1
        // Predicated region
        $region13: #{tpu_custom_call.1} parent=11 // pred_check
          %p99 = pneg %p58
        $region14: #{tpu_custom_call.1} parent=11 // pred_check_branch
          %101 = sbr.rel (%p99) target = $region16
        $region15: #{tpu_custom_call.1} parent=11 // pred_region
          _
        $region16: #{tpu_custom_call.1} parent=11 // pred_fallthru
          _
      $region12: #{tpu_custom_call.1} parent=5 // pred_fallthru
        _
      %p102 = scmp.lt.s32.totalorder %s11, 2
      // Predicated region
      $region17: #{tpu_custom_call.1} parent=5 // pred_check
        %p103 = pneg %p102
      $region18: #{tpu_custom_call.1} parent=5 // pred_check_branch
        %105 = sbr.rel (%p103) target = $region20
      $region19: #{tpu_custom_call.1} parent=5 // pred_region
        // Predicated region
        $region21: #{tpu_custom_call.1} parent=19 // pred_check
          %p106 = pneg %p31
        $region22: #{tpu_custom_call.1} parent=19 // pred_check_branch
          %108 = sbr.rel (%p106) target = $region24
        $region23: #{tpu_custom_call.1} parent=19 // pred_region
          %s109 = smul.u32 32, %s11
          %p110 = scmp.lt.s32.totalorder %s109, 63
          %s111 = scalar_select %p110, %s109, 63
          %s112 = smul.addr %s111, 8
          %s113 = scalar_lea.vmem %s0, %s112
          %s114 = smul.u32 32, %s11
        $region24: #{tpu_custom_call.1} parent=19 // pred_fallthru
          _
      $region20: #{tpu_custom_call.1} parent=5 // pred_fallthru
        _
      %p115 = scmp.le.s32.totalorder 1, %s11
      %p116 = scmp.lt.s32.totalorder %s11, 3
      %p117 = pnand %p115, %p116
      %p118 = pneg %p117
      // Predicated region
      $region25: #{tpu_custom_call.1} parent=5 // pred_check
        _
      $region26: #{tpu_custom_call.1} parent=5 // pred_check_branch
        %120 = sbr.rel (%p117) target = $region28
      $region27: #{tpu_custom_call.1} parent=5 // pred_region
        %s121 = ssub.s32 %s11, 1
        %s122 = smul.u32 32, %s16
        %p123 = scmp.lt.s32.totalorder %s122, 63
        %s124 = scalar_select %p123, %s122, 63
        %s125 = smul.addr %s124, 8
        %s126 = scalar_lea.vmem %s0, %s125
        %p127 = pneg %p37
        %p128 = pneg %p34
        %p129 = pneg %p58
        %p130 = pneg %p55
        %p131 = pneg %p84
        %p132 = pneg %p81
        %s133 = sand.u32 %s71, 1
        %s134 = scalar_lea.sflag [#allocation3], %s133
        %s135 = sand.u32 %s71, 1
        %s136 = smul.addr %s135, 256
        %s137 = scalar_lea.vmem [#allocation2], %s136
        %s138 = smul.u32 32, %s16
        %p139 = scmp.lt.s32.totalorder %s138, 63
        %s140 = scalar_select %p139, %s138, 63
        %s141 = smul.addr %s140, 8
        %s142 = scalar_lea.vmem %s0, %s141
        %s143 = smul.u32 32, %s16
        %s144 = smul.u32 32, %s16
        %v146 = vld [vmem:[%s1] sm:$0xf]
        %v147 = vld [vmem:[%s1 + $0x4] sm:$0xf]
        %v148 = vld [vmem:[%s1 + $0x8] sm:$0xf]
        %v149 = vld [vmem:[%s1 + $0xc] sm:$0xf]
        %v150 = vld [vmem:[%s1 + $0x10] sm:$0x1]
        %v151 = vunpack.c.l.bf16 %v150
        %v152 = vld [vmem:[%s1 + $0x18] sm:$0xf]
        %v153 = vld [vmem:[%s1 + $0x1c] sm:$0xf]
        %v154 = vld [vmem:[%s1 + $0x20] sm:$0xf]
        %v155 = vld [vmem:[%s1 + $0x24] sm:$0xf]
        %v156 = vld [vmem:[%s1 + $0x28] sm:$0xf]
        %v157 = vld [vmem:[%s1 + $0x2c] sm:$0xf]
        %v158 = vld [vmem:[%s1 + $0x30] sm:$0xf]
        %v159 = vld [vmem:[%s1 + $0x34] sm:$0xf]
        %v160 = vld [vmem:[%s1 + $0x38] sm:$0xf]
        %v161 = vld [vmem:[%s1 + $0x3c] sm:$0xf]
        %v162 = vld [vmem:[%s1 + $0x40] sm:$0xf]
        %v163 = vld [vmem:[%s1 + $0x44] sm:$0xf]
        %v164 = vld [vmem:[%s1 + $0x48] sm:$0xf]
        %v165 = vld [vmem:[%s1 + $0x4c] sm:$0xf]
        %v166 = vld [vmem:[%s1 + $0x50] sm:$0xf]
        %v167 = vld [vmem:[%s1 + $0x54] sm:$0xf]
        %v168 = vld [vmem:[%s1 + $0x58] sm:$0x1]
        %v169 = vunpack.c.l.bf16 %v168
        %v170 = vld [vmem:[%s142] sm:$0xff]
        %v171 = vld [vmem:[%s142 + $0x8] sm:$0xff]
        %v172 = vld [vmem:[%s142 + $0x10] sm:$0xff]
        %v173 = vld [vmem:[%s142 + $0x18] sm:$0xff]
        %v174 = vld [vmem:[%s142 + $0x20] sm:$0xff]
        %v175 = vld [vmem:[%s142 + $0x28] sm:$0xff]
        %v176 = vld [vmem:[%s142 + $0x30] sm:$0xff]
        %v177 = vld [vmem:[%s142 + $0x38] sm:$0xff]
        %v178 = vld [vmem:[%s142 + $0x40] sm:$0xff]
        %v179 = vld [vmem:[%s142 + $0x48] sm:$0xff]
        %v180 = vld [vmem:[%s142 + $0x50] sm:$0xff]
        %v181 = vld [vmem:[%s142 + $0x58] sm:$0xff]
        %v182 = vld [vmem:[%s142 + $0x60] sm:$0xff]
        %v183 = vld [vmem:[%s142 + $0x68] sm:$0xff]
        %v184 = vld [vmem:[%s142 + $0x70] sm:$0xff]
        %v185 = vld [vmem:[%s142 + $0x78] sm:$0xff]
        %v186 = vld [vmem:[%s142 + $0x80] sm:$0xff]
        %v187 = vld [vmem:[%s142 + $0x88] sm:$0xff]
        %v188 = vld [vmem:[%s142 + $0x90] sm:$0xff]
        %v189 = vld [vmem:[%s142 + $0x98] sm:$0xff]
        %v190 = vld [vmem:[%s142 + $0xa0] sm:$0xff]
        %v191 = vld [vmem:[%s142 + $0xa8] sm:$0xff]
        %v192 = vld [vmem:[%s142 + $0xb0] sm:$0xff]
        %v193 = vld [vmem:[%s142 + $0xb8] sm:$0xff]
        %v194 = vld [vmem:[%s142 + $0xc0] sm:$0xff]
        %v195 = vld [vmem:[%s142 + $0xc8] sm:$0xff]
        %v196 = vld [vmem:[%s142 + $0xd0] sm:$0xff]
        %v197 = vld [vmem:[%s142 + $0xd8] sm:$0xff]
        %v198 = vld [vmem:[%s142 + $0xe0] sm:$0xff]
        %v199 = vld [vmem:[%s142 + $0xe8] sm:$0xff]
        %v200 = vld [vmem:[%s142 + $0xf0] sm:$0xff]
        %v201 = vld [vmem:[%s142 + $0xf8] sm:$0xff]
        %v202 = vpack.c.bf16 %v171, %v170
        %v203 = vpack.c.bf16 %v173, %v172
        %v204 = vpack.c.bf16 %v175, %v174
        %v205 = vpack.c.bf16 %v177, %v176
        %v206 = vpack.c.bf16 %v179, %v178
        %v207 = vpack.c.bf16 %v181, %v180
        %v208 = vpack.c.bf16 %v183, %v182
        %v209 = vpack.c.bf16 %v185, %v184
        %v210 = vpack.c.bf16 %v187, %v186
        %v211 = vpack.c.bf16 %v189, %v188
        %v212 = vpack.c.bf16 %v191, %v190
        %v213 = vpack.c.bf16 %v193, %v192
        %v214 = vpack.c.bf16 %v195, %v194
        %v215 = vpack.c.bf16 %v197, %v196
        %v216 = vpack.c.bf16 %v199, %v198
        %v217 = vpack.c.bf16 %v201, %v200
        %v218 = vlaneseq
        %v219 = vshrl.u32 %v218, 7
        %v220 = vsub.s32 0, %v219
        %v221 = vrot.slane %v151, %v220
        %v226 = vunpack.c.l.b16 %v146
        %v227 = vunpack.c.l.b16 %v147
        %v228 = vunpack.c.l.b16 %v148
        %v229 = vunpack.c.l.b16 %v149
        %v230 = vpack.c.b16 %v227, %v226
        %v231 = vpack.c.b16 %v229, %v228
        %vm234 = vcmask 261120
        %v236 = vsel %vm234, %v202, 0
        %v239 = vsel %vm234, %v203, 0
        %v242 = vsel %vm234, %v204, 0
        %v245 = vsel %vm234, %v205, 0
        %v248 = vsel %vm234, %v206, 0
        %v251 = vsel %vm234, %v207, 0
        %v254 = vsel %vm234, %v208, 0
        %v257 = vsel %vm234, %v209, 0
        %v260 = vsel %vm234, %v210, 0
        %v263 = vsel %vm234, %v211, 0
        %v266 = vsel %vm234, %v212, 0
        %v269 = vsel %vm234, %v213, 0
        %v272 = vsel %vm234, %v214, 0
        %v275 = vsel %vm234, %v215, 0
        %v278 = vsel %vm234, %v216, 0
        %v281 = vsel %vm234, %v217, 0
        %283 = vmatprep.subr.bf16.mxu0 0
        %284 = vmatpush1.bf16.msra.mxu0 %v230
        %285 = vmatprep.subr.bf16.mxu0 0
        %286 = vmatpush1.bf16.msra.mxu0 %v231
        %287 = vmatprep.subr.bf16.mxu0 0
        %288 = vmatpush1.bf16.msra.mxu0 0
        %289 = vmatprep.subr.bf16.mxu0 0
        %290 = vmatpush1.bf16.msra.mxu0 0
        %291 = vmatprep.subr.bf16.mxu0 0
        %292 = vmatpush1.bf16.msra.mxu0 0
        %293 = vmatprep.subr.bf16.mxu0 0
        %294 = vmatpush1.bf16.msra.mxu0 0
        %295 = vmatprep.subr.bf16.mxu0 0
        %296 = vmatpush1.bf16.msra.mxu0 0
        %297 = vmatprep.subr.bf16.mxu0 0
        %298 = vmatpush1.bf16.msra.mxu0 0
        %299 = vmatprep.subr.bf16.mxu0 0
        %300 = vmatpush1.bf16.msra.mxu0 0
        %301 = vmatprep.subr.bf16.mxu0 0
        %302 = vmatpush1.bf16.msra.mxu0 0
        %303 = vmatprep.subr.bf16.mxu0 0
        %304 = vmatpush1.bf16.msra.mxu0 0
        %305 = vmatprep.subr.bf16.mxu0 0
        %306 = vmatpush1.bf16.msra.mxu0 0
        %307 = vmatprep.subr.bf16.mxu0 0
        %308 = vmatpush1.bf16.msra.mxu0 0
        %309 = vmatprep.subr.bf16.mxu0 0
        %310 = vmatpush1.bf16.msra.mxu0 0
        %311 = vmatprep.subr.bf16.mxu0 0
        %312 = vmatpush1.bf16.msra.mxu0 0
        %313 = vmatprep.subr.bf16.mxu0 0
        %314 = vmatpush1.bf16.msra.mxu0 0
        %315 = vmatprep.mubr.bf16.mxu0 0
        %316 = vmatmul.mubr.bf16.gmra.mrb[0].mxu0 %v236
        %v317 = vpop.f32.mrb[0].mxu0
        %v318 = vadd.f32 %v221, %v317
        %v319 = vpop.f32.mrb[0].mxu0
        %v320 = vpop.f32.mrb[0].mxu0
        %v321 = vadd.f32 %v221, %v320
        %v322 = vpop.f32.mrb[0].mxu0
        %323 = vmatprep.mubr.bf16.mxu0 0
        %324 = vmatmul.mubr.bf16.gmra.mrb[0].mxu0 %v239
        %v325 = vpop.f32.mrb[0].mxu0
        %v326 = vadd.f32 %v221, %v325
        %v327 = vpop.f32.mrb[0].mxu0
        %v328 = vpop.f32.mrb[0].mxu0
        %v329 = vadd.f32 %v221, %v328
        %v330 = vpop.f32.mrb[0].mxu0
        %331 = vmatprep.mubr.bf16.mxu0 0
        %332 = vmatmul.mubr.bf16.gmra.mrb[0].mxu0 %v242
        %v333 = vpop.f32.mrb[0].mxu0
        %v334 = vadd.f32 %v221, %v333
        %v335 = vpop.f32.mrb[0].mxu0
        %v336 = vpop.f32.mrb[0].mxu0
        %v337 = vadd.f32 %v221, %v336
        %v338 = vpop.f32.mrb[0].mxu0
        %339 = vmatprep.mubr.bf16.mxu0 0
        %340 = vmatmul.mubr.bf16.gmra.mrb[0].mxu0 %v245
        %v341 = vpop.f32.mrb[0].mxu0
        %v342 = vadd.f32 %v221, %v341
        %v343 = vpop.f32.mrb[0].mxu0
        %v344 = vpop.f32.mrb[0].mxu0
        %v345 = vadd.f32 %v221, %v344
        %v346 = vpop.f32.mrb[0].mxu0
        %347 = vmatprep.mubr.bf16.mxu0 0
        %348 = vmatmul.mubr.bf16.gmra.mrb[0].mxu0 %v248
        %v349 = vpop.f32.mrb[0].mxu0
        %v350 = vadd.f32 %v221, %v349
        %v351 = vpop.f32.mrb[0].mxu0
        %v352 = vpop.f32.mrb[0].mxu0
        %v353 = vadd.f32 %v221, %v352
        %v354 = vpop.f32.mrb[0].mxu0
        %355 = vmatprep.mubr.bf16.mxu0 0
        %356 = vmatmul.mubr.bf16.gmra.mrb[0].mxu0 %v251
        %v357 = vpop.f32.mrb[0].mxu0
        %v358 = vadd.f32 %v221, %v357
        %v359 = vpop.f32.mrb[0].mxu0
        %v360 = vpop.f32.mrb[0].mxu0
        %v361 = vadd.f32 %v221, %v360
        %v362 = vpop.f32.mrb[0].mxu0
        %363 = vmatprep.mubr.bf16.mxu0 0
        %364 = vmatmul.mubr.bf16.gmra.mrb[0].mxu0 %v254
        %v365 = vpop.f32.mrb[0].mxu0
        %v366 = vadd.f32 %v221, %v365
        %v367 = vpop.f32.mrb[0].mxu0
        %v368 = vpop.f32.mrb[0].mxu0
        %v369 = vadd.f32 %v221, %v368
        %v370 = vpop.f32.mrb[0].mxu0
        %371 = vmatprep.mubr.bf16.mxu0 0
        %372 = vmatmul.mubr.bf16.gmra.mrb[0].mxu0 %v257
        %v373 = vpop.f32.mrb[0].mxu0
        %v374 = vadd.f32 %v221, %v373
        %v375 = vpop.f32.mrb[0].mxu0
        %v376 = vpop.f32.mrb[0].mxu0
        %v377 = vadd.f32 %v221, %v376
        %v378 = vpop.f32.mrb[0].mxu0
        %379 = vmatprep.mubr.bf16.mxu0 0
        %380 = vmatmul.mubr.bf16.gmra.mrb[0].mxu0 %v260
        %v381 = vpop.f32.mrb[0].mxu0
        %v382 = vadd.f32 %v221, %v381
        %v383 = vpop.f32.mrb[0].mxu0
        %v384 = vpop.f32.mrb[0].mxu0
        %v385 = vadd.f32 %v221, %v384
        %v386 = vpop.f32.mrb[0].mxu0
        %387 = vmatprep.mubr.bf16.mxu0 0
        %388 = vmatmul.mubr.bf16.gmra.mrb[0].mxu0 %v263
        %v389 = vpop.f32.mrb[0].mxu0
        %v390 = vadd.f32 %v221, %v389
        %v391 = vpop.f32.mrb[0].mxu0
        %v392 = vpop.f32.mrb[0].mxu0
        %v393 = vadd.f32 %v221, %v392
        %v394 = vpop.f32.mrb[0].mxu0
        %395 = vmatprep.mubr.bf16.mxu0 0
        %396 = vmatmul.mubr.bf16.gmra.mrb[0].mxu0 %v266
        %v397 = vpop.f32.mrb[0].mxu0
        %v398 = vadd.f32 %v221, %v397
        %v399 = vpop.f32.mrb[0].mxu0
        %v400 = vpop.f32.mrb[0].mxu0
        %v401 = vadd.f32 %v221, %v400
        %v402 = vpop.f32.mrb[0].mxu0
        %403 = vmatprep.mubr.bf16.mxu0 0
        %404 = vmatmul.mubr.bf16.gmra.mrb[0].mxu0 %v269
        %v405 = vpop.f32.mrb[0].mxu0
        %v406 = vadd.f32 %v221, %v405
        %v407 = vpop.f32.mrb[0].mxu0
        %v408 = vpop.f32.mrb[0].mxu0
        %v409 = vadd.f32 %v221, %v408
        %v410 = vpop.f32.mrb[0].mxu0
        %411 = vmatprep.mubr.bf16.mxu0 0
        %412 = vmatmul.mubr.bf16.gmra.mrb[0].mxu0 %v272
        %v413 = vpop.f32.mrb[0].mxu0
        %v414 = vadd.f32 %v221, %v413
        %v415 = vpop.f32.mrb[0].mxu0
        %v416 = vpop.f32.mrb[0].mxu0
        %v417 = vadd.f32 %v221, %v416
        %v418 = vpop.f32.mrb[0].mxu0
        %419 = vmatprep.mubr.bf16.mxu0 0
        %420 = vmatmul.mubr.bf16.gmra.mrb[0].mxu0 %v275
        %v421 = vpop.f32.mrb[0].mxu0
        %v422 = vadd.f32 %v221, %v421
        %v423 = vpop.f32.mrb[0].mxu0
        %v424 = vpop.f32.mrb[0].mxu0
        %v425 = vadd.f32 %v221, %v424
        %v426 = vpop.f32.mrb[0].mxu0
        %427 = vmatprep.mubr.bf16.mxu0 0
        %428 = vmatmul.mubr.bf16.gmra.mrb[0].mxu0 %v278
        %v429 = vpop.f32.mrb[0].mxu0
        %v430 = vadd.f32 %v221, %v429
        %v431 = vpop.f32.mrb[0].mxu0
        %v432 = vpop.f32.mrb[0].mxu0
        %v433 = vadd.f32 %v221, %v432
        %v434 = vpop.f32.mrb[0].mxu0
        %435 = vmatprep.mubr.bf16.mxu0 0
        %436 = vmatmul.mubr.bf16.gmra.mrb[0].mxu0 %v281
        %v437 = vpop.f32.mrb[0].mxu0
        %v438 = vadd.f32 %v221, %v437
        %v439 = vpop.f32.mrb[0].mxu0
        %v440 = vpop.f32.mrb[0].mxu0
        %v441 = vadd.f32 %v221, %v440
        %v442 = vpop.f32.mrb[0].mxu0
        %443 = vdwg.mxu0
        %v444 = vtanh.pop %v318
        %v445 = vtanh.pop %v321
        %v446 = vtanh.pop %v326
        %v447 = vtanh.pop %v329
        %v448 = vtanh.pop %v334
        %v449 = vtanh.pop %v337
        %v450 = vtanh.pop %v342
        %v451 = vtanh.pop %v345
        %v452 = vtanh.pop %v350
        %v453 = vtanh.pop %v353
        %v454 = vtanh.pop %v358
        %v455 = vtanh.pop %v361
        %v456 = vtanh.pop %v366
        %v457 = vtanh.pop %v369
        %v458 = vtanh.pop %v374
        %v459 = vtanh.pop %v377
        %v460 = vtanh.pop %v382
        %v461 = vtanh.pop %v385
        %v462 = vtanh.pop %v390
        %v463 = vtanh.pop %v393
        %v464 = vtanh.pop %v398
        %v465 = vtanh.pop %v401
        %v466 = vtanh.pop %v406
        %v467 = vtanh.pop %v409
        %v468 = vtanh.pop %v414
        %v469 = vtanh.pop %v417
        %v470 = vtanh.pop %v422
        %v471 = vtanh.pop %v425
        %v472 = vtanh.pop %v430
        %v473 = vtanh.pop %v433
        %v474 = vtanh.pop %v438
        %v475 = vtanh.pop %v441
        %v476 = vpack.c.bf16 %v445, %v444
        %v477 = vpack.c.bf16 %v447, %v446
        %v478 = vpack.c.bf16 %v449, %v448
        %v479 = vpack.c.bf16 %v451, %v450
        %v480 = vpack.c.bf16 %v453, %v452
        %v481 = vpack.c.bf16 %v455, %v454
        %v482 = vpack.c.bf16 %v457, %v456
        %v483 = vpack.c.bf16 %v459, %v458
        %v484 = vpack.c.bf16 %v461, %v460
        %v485 = vpack.c.bf16 %v463, %v462
        %v486 = vpack.c.bf16 %v465, %v464
        %v487 = vpack.c.bf16 %v467, %v466
        %v488 = vpack.c.bf16 %v469, %v468
        %v489 = vpack.c.bf16 %v471, %v470
        %v490 = vpack.c.bf16 %v473, %v472
        %v491 = vpack.c.bf16 %v475, %v474
        %v492 = vlaneseq
        %v493 = vshrl.u32 %v492, 7
        %v494 = vsub.s32 0, %v493
        %v495 = vrot.slane %v169, %v494
        %v512 = vunpack.c.l.b16 %v152
        %v513 = vunpack.c.l.b16 %v153
        %v514 = vunpack.c.l.b16 %v154
        %v515 = vunpack.c.l.b16 %v155
        %v516 = vunpack.c.l.b16 %v156
        %v517 = vunpack.c.l.b16 %v157
        %v518 = vunpack.c.l.b16 %v158
        %v519 = vunpack.c.l.b16 %v159
        %v520 = vunpack.c.l.b16 %v160
        %v521 = vunpack.c.l.b16 %v161
        %v522 = vunpack.c.l.b16 %v162
        %v523 = vunpack.c.l.b16 %v163
        %v524 = vunpack.c.l.b16 %v164
        %v525 = vunpack.c.l.b16 %v165
        %v526 = vunpack.c.l.b16 %v166
        %v527 = vunpack.c.l.b16 %v167
        %v528 = vpack.c.b16 %v513, %v512
        %v529 = vpack.c.b16 %v515, %v514
        %v530 = vpack.c.b16 %v517, %v516
        %v531 = vpack.c.b16 %v519, %v518
        %v532 = vpack.c.b16 %v521, %v520
        %v533 = vpack.c.b16 %v523, %v522
        %v534 = vpack.c.b16 %v525, %v524
        %v535 = vpack.c.b16 %v527, %v526
        %544 = vmatprep.subr.bf16.mxu0 0
        %545 = vmatpush1.bf16.msra.mxu0 %v528
        %546 = vmatprep.subr.bf16.mxu0 0
        %547 = vmatpush1.bf16.msra.mxu0 %v529
        %548 = vmatprep.subr.bf16.mxu0 0
        %549 = vmatpush1.bf16.msra.mxu0 %v530
        %550 = vmatprep.subr.bf16.mxu0 0
        %551 = vmatpush1.bf16.msra.mxu0 %v531
        %552 = vmatprep.subr.bf16.mxu0 0
        %553 = vmatpush1.bf16.msra.mxu0 %v532
        %554 = vmatprep.subr.bf16.mxu0 0
        %555 = vmatpush1.bf16.msra.mxu0 %v533
        %556 = vmatprep.subr.bf16.mxu0 0
        %557 = vmatpush1.bf16.msra.mxu0 %v534
        %558 = vmatprep.subr.bf16.mxu0 0
        %559 = vmatpush1.bf16.msra.mxu0 %v535
        %560 = vmatprep.subr.bf16.mxu0 0
        %561 = vmatpush1.bf16.msra.mxu0 0
        %562 = vmatprep.subr.bf16.mxu0 0
        %563 = vmatpush1.bf16.msra.mxu0 0
        %564 = vmatprep.subr.bf16.mxu0 0
        %565 = vmatpush1.bf16.msra.mxu0 0
        %566 = vmatprep.subr.bf16.mxu0 0
        %567 = vmatpush1.bf16.msra.mxu0 0
        %568 = vmatprep.subr.bf16.mxu0 0
        %569 = vmatpush1.bf16.msra.mxu0 0
        %570 = vmatprep.subr.bf16.mxu0 0
        %571 = vmatpush1.bf16.msra.mxu0 0
        %572 = vmatprep.subr.bf16.mxu0 0
        %573 = vmatpush1.bf16.msra.mxu0 0
        %574 = vmatprep.subr.bf16.mxu0 0
        %575 = vmatpush1.bf16.msra.mxu0 0
        %576 = vmatprep.mubr.bf16.mxu0 0
        %577 = vmatmul.mubr.bf16.gmra.mrb[0].mxu0 %v476
        %v578 = vpop.f32.mrb[0].mxu0
        %v579 = vadd.f32 %v495, %v578
        %v580 = vpop.f32.mrb[0].mxu0
        %v581 = vpop.f32.mrb[0].mxu0
        %v582 = vadd.f32 %v495, %v581
        %v583 = vpop.f32.mrb[0].mxu0
        %584 = vmatprep.mubr.bf16.mxu0 0
        %585 = vmatmul.mubr.bf16.gmra.mrb[0].mxu0 %v477
        %v586 = vpop.f32.mrb[0].mxu0
        %v587 = vadd.f32 %v495, %v586
        %v588 = vpop.f32.mrb[0].mxu0
        %v589 = vpop.f32.mrb[0].mxu0
        %v590 = vadd.f32 %v495, %v589
        %v591 = vpop.f32.mrb[0].mxu0
        %592 = vmatprep.mubr.bf16.mxu0 0
        %593 = vmatmul.mubr.bf16.gmra.mrb[0].mxu0 %v478
        %v594 = vpop.f32.mrb[0].mxu0
        %v595 = vadd.f32 %v495, %v594
        %v596 = vpop.f32.mrb[0].mxu0
        %v597 = vpop.f32.mrb[0].mxu0
        %v598 = vadd.f32 %v495, %v597
        %v599 = vpop.f32.mrb[0].mxu0
        %600 = vmatprep.mubr.bf16.mxu0 0
        %601 = vmatmul.mubr.bf16.gmra.mrb[0].mxu0 %v479
        %v602 = vpop.f32.mrb[0].mxu0
        %v603 = vadd.f32 %v495, %v602
        %v604 = vpop.f32.mrb[0].mxu0
        %v605 = vpop.f32.mrb[0].mxu0
        %v606 = vadd.f32 %v495, %v605
        %v607 = vpop.f32.mrb[0].mxu0
        %608 = vmatprep.mubr.bf16.mxu0 0
        %609 = vmatmul.mubr.bf16.gmra.mrb[0].mxu0 %v480
        %v610 = vpop.f32.mrb[0].mxu0
        %v611 = vadd.f32 %v495, %v610
        %v612 = vpop.f32.mrb[0].mxu0
        %v613 = vpop.f32.mrb[0].mxu0
        %v614 = vadd.f32 %v495, %v613
        %v615 = vpop.f32.mrb[0].mxu0
        %616 = vmatprep.mubr.bf16.mxu0 0
        %617 = vmatmul.mubr.bf16.gmra.mrb[0].mxu0 %v481
        %v618 = vpop.f32.mrb[0].mxu0
        %v619 = vadd.f32 %v495, %v618
        %v620 = vpop.f32.mrb[0].mxu0
        %v621 = vpop.f32.mrb[0].mxu0
        %v622 = vadd.f32 %v495, %v621
        %v623 = vpop.f32.mrb[0].mxu0
        %624 = vmatprep.mubr.bf16.mxu0 0
        %625 = vmatmul.mubr.bf16.gmra.mrb[0].mxu0 %v482
        %v626 = vpop.f32.mrb[0].mxu0
        %v627 = vadd.f32 %v495, %v626
        %v628 = vpop.f32.mrb[0].mxu0
        %v629 = vpop.f32.mrb[0].mxu0
        %v630 = vadd.f32 %v495, %v629
        %v631 = vpop.f32.mrb[0].mxu0
        %632 = vmatprep.mubr.bf16.mxu0 0
        %633 = vmatmul.mubr.bf16.gmra.mrb[0].mxu0 %v483
        %v634 = vpop.f32.mrb[0].mxu0
        %v635 = vadd.f32 %v495, %v634
        %v636 = vpop.f32.mrb[0].mxu0
        %v637 = vpop.f32.mrb[0].mxu0
        %v638 = vadd.f32 %v495, %v637
        %v639 = vpop.f32.mrb[0].mxu0
        %640 = vmatprep.mubr.bf16.mxu0 0
        %641 = vmatmul.mubr.bf16.gmra.mrb[0].mxu0 %v484
        %v642 = vpop.f32.mrb[0].mxu0
        %v643 = vadd.f32 %v495, %v642
        %v644 = vpop.f32.mrb[0].mxu0
        %v645 = vpop.f32.mrb[0].mxu0
        %v646 = vadd.f32 %v495, %v645
        %v647 = vpop.f32.mrb[0].mxu0
        %648 = vmatprep.mubr.bf16.mxu0 0
        %649 = vmatmul.mubr.bf16.gmra.mrb[0].mxu0 %v485
        %v650 = vpop.f32.mrb[0].mxu0
        %v651 = vadd.f32 %v495, %v650
        %v652 = vpop.f32.mrb[0].mxu0
        %v653 = vpop.f32.mrb[0].mxu0
        %v654 = vadd.f32 %v495, %v653
        %v655 = vpop.f32.mrb[0].mxu0
        %656 = vmatprep.mubr.bf16.mxu0 0
        %657 = vmatmul.mubr.bf16.gmra.mrb[0].mxu0 %v486
        %v658 = vpop.f32.mrb[0].mxu0
        %v659 = vadd.f32 %v495, %v658
        %v660 = vpop.f32.mrb[0].mxu0
        %v661 = vpop.f32.mrb[0].mxu0
        %v662 = vadd.f32 %v495, %v661
        %v663 = vpop.f32.mrb[0].mxu0
        %664 = vmatprep.mubr.bf16.mxu0 0
        %665 = vmatmul.mubr.bf16.gmra.mrb[0].mxu0 %v487
        %v666 = vpop.f32.mrb[0].mxu0
        %v667 = vadd.f32 %v495, %v666
        %v668 = vpop.f32.mrb[0].mxu0
        %v669 = vpop.f32.mrb[0].mxu0
        %v670 = vadd.f32 %v495, %v669
        %v671 = vpop.f32.mrb[0].mxu0
        %672 = vmatprep.mubr.bf16.mxu0 0
        %673 = vmatmul.mubr.bf16.gmra.mrb[0].mxu0 %v488
        %v674 = vpop.f32.mrb[0].mxu0
        %v675 = vadd.f32 %v495, %v674
        %v676 = vpop.f32.mrb[0].mxu0
        %v677 = vpop.f32.mrb[0].mxu0
        %v678 = vadd.f32 %v495, %v677
        %v679 = vpop.f32.mrb[0].mxu0
        %680 = vmatprep.mubr.bf16.mxu0 0
        %681 = vmatmul.mubr.bf16.gmra.mrb[0].mxu0 %v489
        %v682 = vpop.f32.mrb[0].mxu0
        %v683 = vadd.f32 %v495, %v682
        %v684 = vpop.f32.mrb[0].mxu0
        %v685 = vpop.f32.mrb[0].mxu0
        %v686 = vadd.f32 %v495, %v685
        %v687 = vpop.f32.mrb[0].mxu0
        %688 = vmatprep.mubr.bf16.mxu0 0
        %689 = vmatmul.mubr.bf16.gmra.mrb[0].mxu0 %v490
        %v690 = vpop.f32.mrb[0].mxu0
        %v691 = vadd.f32 %v495, %v690
        %v692 = vpop.f32.mrb[0].mxu0
        %v693 = vpop.f32.mrb[0].mxu0
        %v694 = vadd.f32 %v495, %v693
        %v695 = vpop.f32.mrb[0].mxu0
        %696 = vmatprep.mubr.bf16.mxu0 0
        %697 = vmatmul.mubr.bf16.gmra.mrb[0].mxu0 %v491
        %v698 = vpop.f32.mrb[0].mxu0
        %v699 = vadd.f32 %v495, %v698
        %v700 = vpop.f32.mrb[0].mxu0
        %v701 = vpop.f32.mrb[0].mxu0
        %v702 = vadd.f32 %v495, %v701
        %v703 = vpop.f32.mrb[0].mxu0
        %704 = vdwg.mxu0
        %705 = vst [vmem:[%s137] sm:$0xff] %v579
        %706 = vst [vmem:[%s137 + $0x8] sm:$0xff] %v582
        %707 = vst [vmem:[%s137 + $0x10] sm:$0xff] %v587
        %708 = vst [vmem:[%s137 + $0x18] sm:$0xff] %v590
        %709 = vst [vmem:[%s137 + $0x20] sm:$0xff] %v595
        %710 = vst [vmem:[%s137 + $0x28] sm:$0xff] %v598
        %711 = vst [vmem:[%s137 + $0x30] sm:$0xff] %v603
        %712 = vst [vmem:[%s137 + $0x38] sm:$0xff] %v606
        %713 = vst [vmem:[%s137 + $0x40] sm:$0xff] %v611
        %714 = vst [vmem:[%s137 + $0x48] sm:$0xff] %v614
        %715 = vst [vmem:[%s137 + $0x50] sm:$0xff] %v619
        %716 = vst [vmem:[%s137 + $0x58] sm:$0xff] %v622
        %717 = vst [vmem:[%s137 + $0x60] sm:$0xff] %v627
        %718 = vst [vmem:[%s137 + $0x68] sm:$0xff] %v630
        %719 = vst [vmem:[%s137 + $0x70] sm:$0xff] %v635
        %720 = vst [vmem:[%s137 + $0x78] sm:$0xff] %v638
        %721 = vst [vmem:[%s137 + $0x80] sm:$0xff] %v643
        %722 = vst [vmem:[%s137 + $0x88] sm:$0xff] %v646
        %723 = vst [vmem:[%s137 + $0x90] sm:$0xff] %v651
        %724 = vst [vmem:[%s137 + $0x98] sm:$0xff] %v654
        %725 = vst [vmem:[%s137 + $0xa0] sm:$0xff] %v659
        %726 = vst [vmem:[%s137 + $0xa8] sm:$0xff] %v662
        %727 = vst [vmem:[%s137 + $0xb0] sm:$0xff] %v667
        %728 = vst [vmem:[%s137 + $0xb8] sm:$0xff] %v670
        %729 = vst [vmem:[%s137 + $0xc0] sm:$0xff] %v675
        %730 = vst [vmem:[%s137 + $0xc8] sm:$0xff] %v678
        %731 = vst [vmem:[%s137 + $0xd0] sm:$0xff] %v683
        %732 = vst [vmem:[%s137 + $0xd8] sm:$0xff] %v686
        %733 = vst [vmem:[%s137 + $0xe0] sm:$0xff] %v691
        %734 = vst [vmem:[%s137 + $0xe8] sm:$0xff] %v694
        %735 = vst [vmem:[%s137 + $0xf0] sm:$0xff] %v699
        %736 = vst [vmem:[%s137 + $0xf8] sm:$0xff] %v702
        %s737 = sand.u32 %s71, 1
        %s738 = scalar_lea.sflag [#allocation3], %s737
        %s739 = sand.u32 %s71, 1
        %s740 = smul.addr %s739, 256
        %s741 = scalar_lea.vmem [#allocation2], %s740
        // Predicated region
        $region29: #{tpu_custom_call.1} parent=27 // pred_check
          %p742 = pneg %p81
        $region30: #{tpu_custom_call.1} parent=27 // pred_check_branch
          %744 = sbr.rel (%p742) target = $region32
        $region31: #{tpu_custom_call.1} parent=27 // pred_region
          %s745 = smul.u32 32, %s16
          %s747 = ssub.s32 4096, 4096
          %748 = vsyncadd %s738, %s747
          %s749 = smul.addr %s745, 128
          %s750 = scalar_lea.hbm %s2, %s749
          %s751 = sshll.u32 %s741, 4
          %s752 = int_to_ptr.vmem [resolvable:$true] %s751
          %757 = dma.vmem_to_hbm [thread:$0]  %s752, 4096, %s750, %s738, 128, 128, 8
        $region32: #{tpu_custom_call.1} parent=27 // pred_fallthru
          _
      $region28: #{tpu_custom_call.1} parent=5 // pred_fallthru
        _
      %p758 = scmp.le.s32.totalorder 2, %s11
      // Predicated region
      $region33: #{tpu_custom_call.1} parent=5 // pred_check
        %p759 = pneg %p758
      $region34: #{tpu_custom_call.1} parent=5 // pred_check_branch
        %761 = sbr.rel (%p759) target = $region36
      $region35: #{tpu_custom_call.1} parent=5 // pred_region
        %s762 = ssub.s32 %s11, 2
        // Predicated region
        $region37: #{tpu_custom_call.1} parent=35 // pred_check
          %p763 = pneg %p87
        $region38: #{tpu_custom_call.1} parent=35 // pred_check_branch
          %765 = sbr.rel (%p763) target = $region40
        $region39: #{tpu_custom_call.1} parent=35 // pred_region
          %s766 = sand.u32 %s72, 1
          %s767 = scalar_lea.sflag [#allocation3], %s766
          %s768 = sand.u32 %s72, 1
          %s769 = smul.addr %s768, 256
          %s770 = scalar_lea.vmem [#allocation2], %s769
          %771 = dma.done %s767, 4096
        $region40: #{tpu_custom_call.1} parent=35 // pred_fallthru
          _
      $region36: #{tpu_custom_call.1} parent=5 // pred_fallthru
        _
    $region6: #{tpu_custom_call.1} parent=1 // loop_footer
      %s15 = sadd.s32 1, %s11
    $region7: #{tpu_custom_call.1} parent=1 // loop_footer_branch
      %10 = sbr.rel target = $region3
    $region8: #{tpu_custom_call.1} parent=1 // loop_exit
      _
    %772 = vsyncpa [#allocation3], 1
    %s773 = scalar_lea.sflag [#allocation3], 1
    %774 = vsyncpa %s773, 1

</llo_original>
